<compile_context>
chip_gen: v7x
topology: tpu7x:2x2x1
jax: 0.10.0
libtpu: 0.0.40
codegen_flags: <defaults>
</compile_context>

<pallas_src>
import functools

import jax
import jax.numpy as jnp
from jax.experimental import pallas as pl
from jax.experimental.pallas import tpu as pltpu


def _round_up(x, m):
    return ((x + m - 1) // m) * m


# -----------------------------------------------------------------------------
# Kernel: one batch tile of the full 7-layer forward pass.
# -----------------------------------------------------------------------------
def _gen_classifier_kernel(x_ref, w1_ref, b1_ref, wmid_ref, bmid_ref,
                           w7_ref, b7_ref, out_ref, *, n_mid, mxu_dtype):
    x = x_ref[...]                                             # (tb, d_in)
    if x.dtype != mxu_dtype:                                   # static at trace time
        x = x.astype(mxu_dtype)

    # layer1: Linear(d_in -> Hp) + ReLU
    h = jnp.dot(x, w1_ref[...], preferred_element_type=jnp.float32) + b1_ref[...]
    h = jnp.maximum(h, 0.0)

    # layers 2..6: Linear(Hp -> Hp) + ReLU (weights stacked in a single ref).
    for l in range(n_mid):                                     # static -> unrolled
        h = jnp.dot(h.astype(mxu_dtype), wmid_ref[l],
                    preferred_element_type=jnp.float32) + bmid_ref[l:l + 1, :]
        h = jnp.maximum(h, 0.0)

    # layer7: Linear(Hp -> d_out) + Sigmoid.  Only the true d_out columns exist,
    # so the writeback is exactly the data the module returns.
    logits = jnp.dot(h.astype(mxu_dtype), w7_ref[...],
                     preferred_element_type=jnp.float32) + b7_ref[...]
    out_ref[...] = jax.nn.sigmoid(logits).astype(out_ref.dtype)


# -----------------------------------------------------------------------------
# Parameter construction (PyTorch nn.Linear-style uniform init, weights stored
# transposed as (in, out) so the kernel computes y = x @ W + b).
# -----------------------------------------------------------------------------
def init_params(key, n, m, k):
    fact1, fact2, fact3 = 2 ** 3, 2 ** 4, 2 ** 5
    d_in = n * m * k
    l_dim = 1
    dims = [
        (d_in, n // fact1),          # layer1
        (n // fact1, n // fact1),    # layer2
        (n // fact1, n // fact2),    # layer3
        (n // fact2, n // fact2),    # layer4
        (n // fact2, n // fact3),    # layer5
        (n // fact3, n // fact3),    # layer6
        (n // fact3, l_dim * k),     # layer7
    ]
    params = []
    for (fan_in, fan_out) in dims:
        key, kw, kb = jax.random.split(key, 3)
        bound = 1.0 / jnp.sqrt(fan_in)
        w = jax.random.uniform(kw, (fan_in, fan_out), jnp.float32, -bound, bound)
        bv = jax.random.uniform(kb, (fan_out,), jnp.float32, -bound, bound)
        params.append((w, bv))
    return params


# -----------------------------------------------------------------------------
# Wrapper: pad/stack params, tile over batch, run one pallas_call.
# -----------------------------------------------------------------------------
def generation_classifier_forward(x, params, *, tb=1024, mxu_dtype=jnp.bfloat16):
    """x: (b, n, m, k) float32 or bfloat16.  Returns final_out of shape (B, 1, 1, k)."""
    b, n, m, k = x.shape
    d_in = n * m * k
    l_dim = 1
    d_out = l_dim * k

    hidden_dims = [w.shape[1] for (w, _) in params[:-1]]
    Hp = _round_up(max(hidden_dims), 128)      # pad hidden dims to 128 lanes only
    n_mid = len(params) - 2                    # layers 2..6

    def pad2(a, rows, cols):
        return jnp.pad(a, ((0, rows - a.shape[0]), (0, cols - a.shape[1])))

    # Zero-padding keeps the math exact: padded hidden lanes see zero weights and
    # zero bias, so ReLU keeps them at 0 and they contribute nothing downstream.
    (w1, b1) = params[0]
    w1p = pad2(w1, d_in, Hp).astype(mxu_dtype)
    b1p = pad2(b1.reshape(1, -1), 1, Hp).astype(jnp.float32)

    wmid = jnp.stack([pad2(w, Hp, Hp) for (w, _) in params[1:-1]]).astype(mxu_dtype)
    bmid = jnp.stack([jnp.pad(bv, (0, Hp - bv.shape[0])) for (_, bv) in params[1:-1]]
                     ).astype(jnp.float32)

    (w7, b7) = params[-1]
    w7p = pad2(w7, Hp, d_out).astype(mxu_dtype)          # (Hp, d_out) - no lane pad
    b7p = b7.reshape(1, d_out).astype(jnp.float32)

    # No dtype cast and no batch padding here: both would be extra full HBM passes.
    x_flat = x.reshape(-1, d_in)
    B = x_flat.shape[0]

    # ---- batch-tile selection (all static Python / trace-time arithmetic) -------
    x_row_bytes = d_in * x_flat.dtype.itemsize
    out_row_bytes = d_out * 4
    weight_bytes = ((d_in * Hp + n_mid * Hp * Hp + Hp * d_out)
                    * jnp.dtype(mxu_dtype).itemsize
                    + ((1 + n_mid) * Hp + d_out) * 4)
    VMEM_LIMIT = 32 * 1024 * 1024              # safe on v5e/v6e/v7x
    VMEM_BUDGET = 24 * 1024 * 1024             # headroom under the scoped limit
    # Double-buffered x + out blocks plus (conservatively double-buffered) weights.
    tb_cap = max(8, int((VMEM_BUDGET - 2 * weight_bytes)
                        // (2 * (x_row_bytes + out_row_bytes))) // 8 * 8)
    # TODO(synk): for very large d_in, tile layer1's K dim with a reduction grid
    # axis instead of only shrinking the batch tile.
    tb_max = max(8, min(tb, tb_cap) // 8 * 8)

    if B <= tb_max:
        tb_eff = _round_up(B, 8)               # single (possibly ragged) tile
    else:
        steps = pl.cdiv(B, tb_max)
        steps += steps % 2                     # even step count -> balanced v7x TCs
        tb_eff = _round_up(pl.cdiv(B, steps), 8)
    grid_steps = pl.cdiv(B, tb_eff)
    if grid_steps > 1 and grid_steps % 2 == 1:  # best-effort evenness after rounding
        tb_alt = _round_up(pl.cdiv(B, grid_steps + 1), 8)
        if pl.cdiv(B, tb_alt) % 2 == 0:
            tb_eff = tb_alt
            grid_steps = pl.cdiv(B, tb_eff)

    kernel = functools.partial(_gen_classifier_kernel,
                               n_mid=n_mid, mxu_dtype=mxu_dtype)

    out = pl.pallas_call(
        kernel,
        grid=(grid_steps,),
        in_specs=[
            pl.BlockSpec((tb_eff, d_in), lambda i: (i, 0)),      # x (batch-tiled)
            pl.BlockSpec((d_in, Hp), lambda i: (0, 0)),          # w1
            pl.BlockSpec((1, Hp), lambda i: (0, 0)),             # b1
            pl.BlockSpec((n_mid, Hp, Hp), lambda i: (0, 0, 0)),  # stacked w2..w6
            pl.BlockSpec((n_mid, Hp), lambda i: (0, 0)),         # stacked b2..b6
            pl.BlockSpec((Hp, d_out), lambda i: (0, 0)),         # w7 (true d_out cols)
            pl.BlockSpec((1, d_out), lambda i: (0, 0)),          # b7
        ],
        out_specs=pl.BlockSpec((tb_eff, d_out), lambda i: (i, 0)),
        out_shape=jax.ShapeDtypeStruct((B, d_out), jnp.float32),
        compiler_params=pltpu.CompilerParams(
            dimension_semantics=("parallel",),
            vmem_limit_bytes=VMEM_LIMIT,
        ),
    )(x_flat, w1p, b1p, wmid, bmid, w7p, b7p)

    # Matches PyTorch's final_out.view(-1, 1, l, k); no slicing pass needed.
    return out.reshape(-1, 1, l_dim, k)


# -----------------------------------------------------------------------------
# Pure-JAX reference (f32) for correctness checking.
# -----------------------------------------------------------------------------
def ref_forward(x, params, n, m, k):
    h = x.astype(jnp.float32).reshape(-1, n * m * k)
    for (w, bv) in params[:-1]:
        h = jnp.maximum(h @ w + bv, 0.0)
    w7, b7 = params[-1]
    out = jax.nn.sigmoid(h @ w7 + b7)
    return out.reshape(-1, 1, 1, k)


# -----------------------------------------------------------------------------
# Main
# -----------------------------------------------------------------------------
if __name__ == "__main__":
    # input_activs_shape = (b, n, m, k); n must be divisible by 2**5.
    b, n, m, k = 2, 256, 2, 1
    key = jax.random.PRNGKey(0)
    key, kx = jax.random.split(key)
    x = jax.random.normal(kx, (b, n, m, k), dtype=jnp.float32)

    params = init_params(key, n, m, k)

    out = jax.block_until_ready(generation_classifier_forward(x, params))
    ref = ref_forward(x, params, n, m, k)
    assert out.shape == (b, 1, 1, k), out.shape
    # bf16 MXU operands with f32 accumulation -> loosened tolerance vs f32 ref.
    assert jnp.allclose(out, ref, atol=2e-2, rtol=2e-2), \
        float(jnp.max(jnp.abs(out - ref)))

    # Larger, non-multiple-of-8 batch: single ragged tile, no host-side padding.
    b2 = 300
    key, kx2 = jax.random.split(key)
    x2 = jax.random.normal(kx2, (b2, n, m, k), dtype=jnp.float32)
    out2 = jax.block_until_ready(generation_classifier_forward(x2, params))
    ref2 = ref_forward(x2, params, n, m, k)
    assert out2.shape == (b2, 1, 1, k), out2.shape
    assert jnp.allclose(out2, ref2, atol=2e-2, rtol=2e-2), \
        float(jnp.max(jnp.abs(out2 - ref2)))

    # Small tile override: exercises the multi-step, even grid (4 steps of 80 rows)
    # with a ragged final tile.
    out3 = jax.block_until_ready(generation_classifier_forward(x2, params, tb=128))
    assert out3.shape == (b2, 1, 1, k), out3.shape
    assert jnp.allclose(out3, ref2, atol=2e-2, rtol=2e-2), \
        float(jnp.max(jnp.abs(out3 - ref2)))

    # bf16 input passes straight through (no wrapper cast, no in-kernel cast).
    x2_bf16 = x2.astype(jnp.bfloat16)
    out4 = jax.block_until_ready(generation_classifier_forward(x2_bf16, params))
    ref4 = ref_forward(x2_bf16, params, n, m, k)
    assert out4.shape == (b2, 1, 1, k), out4.shape
    assert jnp.allclose(out4, ref4, atol=2e-2, rtol=2e-2), \
        float(jnp.max(jnp.abs(out4 - ref4)))

    print("KERNEL_OK")
</pallas_src>

<mosaic_0001>
module attributes {stable_mosaic.version = 11 : i64} {
  func.func @_gen_classifier_kernel(%arg0: i32, %arg1: memref<8x512xf32, #tpu.memory_space<vmem>>, %arg2: memref<512x128xbf16, #tpu.memory_space<vmem>>, %arg3: memref<1x128xf32, #tpu.memory_space<vmem>>, %arg4: memref<5x128x128xbf16, #tpu.memory_space<vmem>>, %arg5: memref<5x128xf32, #tpu.memory_space<vmem>>, %arg6: memref<128x1xbf16, #tpu.memory_space<vmem>>, %arg7: memref<1x1xf32, #tpu.memory_space<vmem>>, %arg8: memref<8x1xf32, #tpu.memory_space<vmem>>) attributes {dimension_semantics = [#tpu.dimension_semantics<parallel>], iteration_bounds = array<i64: 1>, scalar_prefetch = 0 : i64, scratch_operands = 0 : i64, tpu.core_type = #tpu.core_type<tc>, window_params = [{transform_indices = @transform_0, window_bounds = array<i64: 8, 512>}, {pipeline_mode = #tpu.pipeline_mode<synchronous>, transform_indices = @transform_1, window_bounds = array<i64: 512, 128>}, {pipeline_mode = #tpu.pipeline_mode<synchronous>, transform_indices = @transform_2, window_bounds = array<i64: 1, 128>}, {pipeline_mode = #tpu.pipeline_mode<synchronous>, transform_indices = @transform_3, window_bounds = array<i64: 5, 128, 128>}, {pipeline_mode = #tpu.pipeline_mode<synchronous>, transform_indices = @transform_4, window_bounds = array<i64: 5, 128>}, {pipeline_mode = #tpu.pipeline_mode<synchronous>, transform_indices = @transform_5, window_bounds = array<i64: 128, 1>}, {pipeline_mode = #tpu.pipeline_mode<synchronous>, transform_indices = @transform_6, window_bounds = array<i64: 1, 1>}, {transform_indices = @transform_7, window_bounds = array<i64: 8, 1>}]} {
    %c0 = arith.constant 0 : index
    %c0_0 = arith.constant 0 : index
    %0 = vector.load %arg1[%c0, %c0_0] : memref<8x512xf32, #tpu.memory_space<vmem>>, vector<8x512xf32>
    %1 = arith.truncf %0 : vector<8x512xf32> to vector<8x512xbf16>
    %c0_1 = arith.constant 0 : index
    %c0_2 = arith.constant 0 : index
    %2 = vector.load %arg2[%c0_1, %c0_2] : memref<512x128xbf16, #tpu.memory_space<vmem>>, vector<512x128xbf16>
    %cst = arith.constant dense<0.000000e+00> : vector<8x128xf32>
    %3 = tpu.matmul %1, %2, %cst {dimension_numbers = #tpu.dot_dimension_numbers<[1], [0], [0], [1], [0, 0, 1, 1], [], []>} : vector<8x512xbf16>, vector<512x128xbf16>, vector<8x128xf32> -> vector<8x128xf32>
    %c0_3 = arith.constant 0 : index
    %c0_4 = arith.constant 0 : index
    %4 = vector.load %arg3[%c0_3, %c0_4] : memref<1x128xf32, #tpu.memory_space<vmem>>, vector<1x128xf32>
    %5 = vector.broadcast %4 : vector<1x128xf32> to vector<8x128xf32>
    %6 = arith.addf %3, %5 : vector<8x128xf32>
    %cst_5 = arith.constant 0.000000e+00 : f32
    %7 = vector.broadcast %cst_5 : f32 to vector<8x128xf32>
    %8 = arith.maximumf %6, %7 : vector<8x128xf32>
    %9 = arith.truncf %8 : vector<8x128xf32> to vector<8x128xbf16>
    %c0_6 = arith.constant 0 : index
    %c0_7 = arith.constant 0 : index
    %c0_8 = arith.constant 0 : index
    %10 = vector.load %arg4[%c0_6, %c0_7, %c0_8] : memref<5x128x128xbf16, #tpu.memory_space<vmem>>, vector<1x128x128xbf16>
    %11 = vector.shape_cast %10 : vector<1x128x128xbf16> to vector<128x128xbf16>
    %cst_9 = arith.constant dense<0.000000e+00> : vector<8x128xf32>
    %12 = tpu.matmul %9, %11, %cst_9 {dimension_numbers = #tpu.dot_dimension_numbers<[1], [0], [0], [1], [0, 0, 1, 1], [], []>} : vector<8x128xbf16>, vector<128x128xbf16>, vector<8x128xf32> -> vector<8x128xf32>
    %c0_10 = arith.constant 0 : index
    %c0_11 = arith.constant 0 : index
    %13 = vector.load %arg5[%c0_10, %c0_11] : memref<5x128xf32, #tpu.memory_space<vmem>>, vector<1x128xf32>
    %14 = vector.broadcast %13 : vector<1x128xf32> to vector<8x128xf32>
    %15 = arith.addf %12, %14 : vector<8x128xf32>
    %cst_12 = arith.constant 0.000000e+00 : f32
    %16 = vector.broadcast %cst_12 : f32 to vector<8x128xf32>
    %17 = arith.maximumf %15, %16 : vector<8x128xf32>
    %18 = arith.truncf %17 : vector<8x128xf32> to vector<8x128xbf16>
    %c1 = arith.constant 1 : index
    %c0_13 = arith.constant 0 : index
    %c0_14 = arith.constant 0 : index
    %19 = vector.load %arg4[%c1, %c0_13, %c0_14] : memref<5x128x128xbf16, #tpu.memory_space<vmem>>, vector<1x128x128xbf16>
    %20 = vector.shape_cast %19 : vector<1x128x128xbf16> to vector<128x128xbf16>
    %cst_15 = arith.constant dense<0.000000e+00> : vector<8x128xf32>
    %21 = tpu.matmul %18, %20, %cst_15 {dimension_numbers = #tpu.dot_dimension_numbers<[1], [0], [0], [1], [0, 0, 1, 1], [], []>} : vector<8x128xbf16>, vector<128x128xbf16>, vector<8x128xf32> -> vector<8x128xf32>
    %c1_16 = arith.constant 1 : index
    %c0_17 = arith.constant 0 : index
    %22 = vector.load %arg5[%c1_16, %c0_17] : memref<5x128xf32, #tpu.memory_space<vmem>>, vector<1x128xf32>
    %23 = vector.broadcast %22 : vector<1x128xf32> to vector<8x128xf32>
    %24 = arith.addf %21, %23 : vector<8x128xf32>
    %cst_18 = arith.constant 0.000000e+00 : f32
    %25 = vector.broadcast %cst_18 : f32 to vector<8x128xf32>
    %26 = arith.maximumf %24, %25 : vector<8x128xf32>
    %27 = arith.truncf %26 : vector<8x128xf32> to vector<8x128xbf16>
    %c2 = arith.constant 2 : index
    %c0_19 = arith.constant 0 : index
    %c0_20 = arith.constant 0 : index
    %28 = vector.load %arg4[%c2, %c0_19, %c0_20] : memref<5x128x128xbf16, #tpu.memory_space<vmem>>, vector<1x128x128xbf16>
    %29 = vector.shape_cast %28 : vector<1x128x128xbf16> to vector<128x128xbf16>
    %cst_21 = arith.constant dense<0.000000e+00> : vector<8x128xf32>
    %30 = tpu.matmul %27, %29, %cst_21 {dimension_numbers = #tpu.dot_dimension_numbers<[1], [0], [0], [1], [0, 0, 1, 1], [], []>} : vector<8x128xbf16>, vector<128x128xbf16>, vector<8x128xf32> -> vector<8x128xf32>
    %c2_22 = arith.constant 2 : index
    %c0_23 = arith.constant 0 : index
    %31 = vector.load %arg5[%c2_22, %c0_23] : memref<5x128xf32, #tpu.memory_space<vmem>>, vector<1x128xf32>
    %32 = vector.broadcast %31 : vector<1x128xf32> to vector<8x128xf32>
    %33 = arith.addf %30, %32 : vector<8x128xf32>
    %cst_24 = arith.constant 0.000000e+00 : f32
    %34 = vector.broadcast %cst_24 : f32 to vector<8x128xf32>
    %35 = arith.maximumf %33, %34 : vector<8x128xf32>
    %36 = arith.truncf %35 : vector<8x128xf32> to vector<8x128xbf16>
    %c3 = arith.constant 3 : index
    %c0_25 = arith.constant 0 : index
    %c0_26 = arith.constant 0 : index
    %37 = vector.load %arg4[%c3, %c0_25, %c0_26] : memref<5x128x128xbf16, #tpu.memory_space<vmem>>, vector<1x128x128xbf16>
    %38 = vector.shape_cast %37 : vector<1x128x128xbf16> to vector<128x128xbf16>
    %cst_27 = arith.constant dense<0.000000e+00> : vector<8x128xf32>
    %39 = tpu.matmul %36, %38, %cst_27 {dimension_numbers = #tpu.dot_dimension_numbers<[1], [0], [0], [1], [0, 0, 1, 1], [], []>} : vector<8x128xbf16>, vector<128x128xbf16>, vector<8x128xf32> -> vector<8x128xf32>
    %c3_28 = arith.constant 3 : index
    %c0_29 = arith.constant 0 : index
    %40 = vector.load %arg5[%c3_28, %c0_29] : memref<5x128xf32, #tpu.memory_space<vmem>>, vector<1x128xf32>
    %41 = vector.broadcast %40 : vector<1x128xf32> to vector<8x128xf32>
    %42 = arith.addf %39, %41 : vector<8x128xf32>
    %cst_30 = arith.constant 0.000000e+00 : f32
    %43 = vector.broadcast %cst_30 : f32 to vector<8x128xf32>
    %44 = arith.maximumf %42, %43 : vector<8x128xf32>
    %45 = arith.truncf %44 : vector<8x128xf32> to vector<8x128xbf16>
    %c4 = arith.constant 4 : index
    %c0_31 = arith.constant 0 : index
    %c0_32 = arith.constant 0 : index
    %46 = vector.load %arg4[%c4, %c0_31, %c0_32] : memref<5x128x128xbf16, #tpu.memory_space<vmem>>, vector<1x128x128xbf16>
    %47 = vector.shape_cast %46 : vector<1x128x128xbf16> to vector<128x128xbf16>
    %cst_33 = arith.constant dense<0.000000e+00> : vector<8x128xf32>
    %48 = tpu.matmul %45, %47, %cst_33 {dimension_numbers = #tpu.dot_dimension_numbers<[1], [0], [0], [1], [0, 0, 1, 1], [], []>} : vector<8x128xbf16>, vector<128x128xbf16>, vector<8x128xf32> -> vector<8x128xf32>
    %c4_34 = arith.constant 4 : index
    %c0_35 = arith.constant 0 : index
    %49 = vector.load %arg5[%c4_34, %c0_35] : memref<5x128xf32, #tpu.memory_space<vmem>>, vector<1x128xf32>
    %50 = vector.broadcast %49 : vector<1x128xf32> to vector<8x128xf32>
    %51 = arith.addf %48, %50 : vector<8x128xf32>
    %cst_36 = arith.constant 0.000000e+00 : f32
    %52 = vector.broadcast %cst_36 : f32 to vector<8x128xf32>
    %53 = arith.maximumf %51, %52 : vector<8x128xf32>
    %54 = arith.truncf %53 : vector<8x128xf32> to vector<8x128xbf16>
    %c0_37 = arith.constant 0 : index
    %c0_38 = arith.constant 0 : index
    %55 = vector.load %arg6[%c0_37, %c0_38] : memref<128x1xbf16, #tpu.memory_space<vmem>>, vector<128x1xbf16>
    %cst_39 = arith.constant dense<0.000000e+00> : vector<8x1xf32>
    %56 = tpu.matmul %54, %55, %cst_39 {dimension_numbers = #tpu.dot_dimension_numbers<[1], [0], [0], [1], [0, 0, 1, 1], [], []>} : vector<8x128xbf16>, vector<128x1xbf16>, vector<8x1xf32> -> vector<8x1xf32>
    %c0_40 = arith.constant 0 : index
    %c0_41 = arith.constant 0 : index
    %57 = vector.load %arg7[%c0_40, %c0_41] : memref<1x1xf32, #tpu.memory_space<vmem>>, vector<1x1xf32>
    %58 = vector.broadcast %57 : vector<1x1xf32> to vector<8x1xf32>
    %59 = arith.addf %56, %58 : vector<8x1xf32>
    %60 = arith.negf %59 : vector<8x1xf32>
    %61 = math.exp %60 : vector<8x1xf32>
    %cst_42 = arith.constant 1.000000e+00 : f32
    %62 = vector.broadcast %cst_42 : f32 to vector<8x1xf32>
    %63 = arith.addf %62, %61 : vector<8x1xf32>
    %64 = arith.divf %62, %63 : vector<8x1xf32>
    %c0_43 = arith.constant 0 : index
    %c0_44 = arith.constant 0 : index
    %65 = vector.load %arg8[%c0_43, %c0_44] : memref<8x1xf32, #tpu.memory_space<vmem>>, vector<8x1xf32>
    tpu.vector_store %arg8[%c0_43, %c0_44], %64 {strides = array<i32>} : memref<8x1xf32, #tpu.memory_space<vmem>>, vector<8x1xf32>,
    return
  }
  func.func @transform_0(%arg0: i32) -> (i32, i32) {
    %c0_i32 = arith.constant 0 : i32
    %c0_i32_0 = arith.constant 0 : i32
    return %arg0, %c0_i32 : i32, i32
  }
  func.func @transform_1(%arg0: i32) -> (i32, i32) {
    %c0_i32 = arith.constant 0 : i32
    %c0_i32_0 = arith.constant 0 : i32
    %c0_i32_1 = arith.constant 0 : i32
    return %c0_i32, %c0_i32_0 : i32, i32
  }
  func.func @transform_2(%arg0: i32) -> (i32, i32) {
    %c0_i32 = arith.constant 0 : i32
    %c0_i32_0 = arith.constant 0 : i32
    %c0_i32_1 = arith.constant 0 : i32
    return %c0_i32, %c0_i32_0 : i32, i32
  }
  func.func @transform_3(%arg0: i32) -> (i32, i32, i32) {
    %c0_i32 = arith.constant 0 : i32
    %c0_i32_0 = arith.constant 0 : i32
    %c0_i32_1 = arith.constant 0 : i32
    %c0_i32_2 = arith.constant 0 : i32
    return %c0_i32, %c0_i32_0, %c0_i32_1 : i32, i32, i32
  }
  func.func @transform_4(%arg0: i32) -> (i32, i32) {
    %c0_i32 = arith.constant 0 : i32
    %c0_i32_0 = arith.constant 0 : i32
    %c0_i32_1 = arith.constant 0 : i32
    return %c0_i32, %c0_i32_0 : i32, i32
  }
  func.func @transform_5(%arg0: i32) -> (i32, i32) {
    %c0_i32 = arith.constant 0 : i32
    %c0_i32_0 = arith.constant 0 : i32
    %c0_i32_1 = arith.constant 0 : i32
    return %c0_i32, %c0_i32_0 : i32, i32
  }
  func.func @transform_6(%arg0: i32) -> (i32, i32) {
    %c0_i32 = arith.constant 0 : i32
    %c0_i32_0 = arith.constant 0 : i32
    %c0_i32_1 = arith.constant 0 : i32
    return %c0_i32, %c0_i32_0 : i32, i32
  }
  func.func @transform_7(%arg0: i32) -> (i32, i32) {
    %c0_i32 = arith.constant 0 : i32
    %c0_i32_0 = arith.constant 0 : i32
    return %arg0, %c0_i32 : i32, i32
  }
}

</mosaic_0001>

<llo_original>
// kernel: tpu_custom_call.1
$region0: #{tpu_custom_call.1}
  #allocation0 [shape = 'u32[]', space=smem, size = 0x4, offset = 0x4, fixed_abs, tag = 'smem constant byte address 0x4 - core index']
  #allocation1 [shape = 'u32[144,128]{1,0:T(1,128)}', space=vmem, size = 0x12000, scoped, tag = 'internal scratch']
  #allocation2 [shape = 'f32[1,1]{1,0:T(1,128)S(1)}', space=vmem, size = 0x200, scoped, tag = 'scoped memory for tpu_custom_call.1']
  %s0 = inlined_call_operand.vmem [shape: f32[2,512], index: 0, kind: input, shape index: {}]
  %s1 = inlined_call_operand.hbm [shape: bf16[512,128], index: 1, kind: input, shape index: {}]
  %s2 = inlined_call_operand.vmem [shape: f32[1,128], index: 2, kind: input, shape index: {}]
  %s3 = inlined_call_operand.hbm [shape: bf16[5,128,128], index: 3, kind: input, shape index: {}]
  %s4 = inlined_call_operand.vmem [shape: f32[5,128], index: 4, kind: input, shape index: {}]
  %s5 = inlined_call_operand.vmem [shape: bf16[128,1], index: 5, kind: input, shape index: {}]
  %s6 = inlined_call_operand.<no memory space> [shape: f32[1,1], index: 6, kind: input, shape index: {}]
  %s7 = inlined_call_operand.vmem [shape: f32[2,1], index: 7, kind: output, shape index: {}]
  %s8 = sld [smem:[#allocation0]]
  $region76: #{tpu_custom_call.1} parent=0
    _
  %s10 = ssub.s32 1, %s8
  %s11 = scalar_select 0, %s10, %s8
  %v12 = vstv %s6
  %13 = vst [vmem:[#allocation2] sm:$0x1] %v12
  $region1: #{tpu_custom_call.1} parent=0
    #allocation3 [shape = 'u8[131072]{0}', space=vmem, size = 0x20000, scoped, tag = 'input window, operand 1, single buffered']
    #allocation4 [shape = 's32[1]{0}', space=sflag, size = 0x4, scoped, tag = 'scoped memory for tpu_custom_call.1']
    #allocation5 [shape = 'u8[163840]{0}', space=vmem, size = 0x28000, scoped, tag = 'input window, operand 3, single buffered']
    #allocation6 [shape = 's32[1]{0}', space=sflag, size = 0x4, scoped, tag = 'scoped memory for tpu_custom_call.1']
    #allocation7 [shape = 'u8[4096]{0}', space=vmem, size = 0x1000, scoped, tag = 'output window, operand 0, single buffered']
    %14 = vsyncpa [#allocation4], 0
    %15 = vsyncpa [#allocation6], 0
    // Predicated region
    $region2: #{tpu_custom_call.1} parent=1 // pred_check
      _
    $region3: #{tpu_custom_call.1} parent=1 // pred_check_branch
      %17 = sbr.rel (0) target = $region5
    $region4: #{tpu_custom_call.1} parent=1 // pred_region
      _
    $region5: #{tpu_custom_call.1} parent=1 // pred_fallthru
      _
    // Predicated region
    $region6: #{tpu_custom_call.1} parent=1 // pred_check
      _
    $region7: #{tpu_custom_call.1} parent=1 // pred_check_branch
      %19 = sbr.rel (0) target = $region9
    $region8: #{tpu_custom_call.1} parent=1 // pred_region
      %s21 = ssub.s32 4096, 4096
      %22 = vsyncadd [#allocation4], %s21
      %s23 = sshll.u32 [#allocation3], 4
      %s24 = int_to_ptr.vmem [resolvable:$true] %s23
      %29 = dma.hbm_to_vmem [thread:$0]  %s1, 4096, %s24, [#allocation4], 64, 64, 4
    $region9: #{tpu_custom_call.1} parent=1 // pred_fallthru
      _
    // Predicated region
    $region10: #{tpu_custom_call.1} parent=1 // pred_check
      _
    $region11: #{tpu_custom_call.1} parent=1 // pred_check_branch
      %31 = sbr.rel (0) target = $region13
    $region12: #{tpu_custom_call.1} parent=1 // pred_region
      _
    $region13: #{tpu_custom_call.1} parent=1 // pred_fallthru
      _
    // Predicated region
    $region14: #{tpu_custom_call.1} parent=1 // pred_check
      _
    $region15: #{tpu_custom_call.1} parent=1 // pred_check_branch
      %33 = sbr.rel (0) target = $region17
    $region16: #{tpu_custom_call.1} parent=1 // pred_region
      %s35 = ssub.s32 5120, 5120
      %36 = vsyncadd [#allocation6], %s35
      %s37 = sshll.u32 [#allocation5], 4
      %s38 = int_to_ptr.vmem [resolvable:$true] %s37
      %43 = dma.hbm_to_vmem [thread:$0]  %s3, 5120, %s38, [#allocation6], 64, 64, 4
    $region17: #{tpu_custom_call.1} parent=1 // pred_fallthru
      _
    // Predicated region
    $region18: #{tpu_custom_call.1} parent=1 // pred_check
      _
    $region19: #{tpu_custom_call.1} parent=1 // pred_check_branch
      %45 = sbr.rel (0) target = $region21
    $region20: #{tpu_custom_call.1} parent=1 // pred_region
      _
    $region21: #{tpu_custom_call.1} parent=1 // pred_fallthru
      _
    // Predicated region
    $region22: #{tpu_custom_call.1} parent=1 // pred_check
      _
    $region23: #{tpu_custom_call.1} parent=1 // pred_check_branch
      %47 = sbr.rel (0) target = $region25
    $region24: #{tpu_custom_call.1} parent=1 // pred_region
      _
    $region25: #{tpu_custom_call.1} parent=1 // pred_fallthru
      _
    // Predicated region
    $region26: #{tpu_custom_call.1} parent=1 // pred_check
      _
    $region27: #{tpu_custom_call.1} parent=1 // pred_check_branch
      %49 = sbr.rel (0) target = $region29
    $region28: #{tpu_custom_call.1} parent=1 // pred_region
      _
    $region29: #{tpu_custom_call.1} parent=1 // pred_fallthru
      _
    // Predicated region
    $region30: #{tpu_custom_call.1} parent=1 // pred_check
      _
    $region31: #{tpu_custom_call.1} parent=1 // pred_check_branch
      %51 = sbr.rel (0) target = $region33
    $region32: #{tpu_custom_call.1} parent=1 // pred_region
      %52 = dma.done [#allocation4], 4096
    $region33: #{tpu_custom_call.1} parent=1 // pred_fallthru
      _
    // Predicated region
    $region34: #{tpu_custom_call.1} parent=1 // pred_check
      _
    $region35: #{tpu_custom_call.1} parent=1 // pred_check_branch
      %54 = sbr.rel (0) target = $region37
    $region36: #{tpu_custom_call.1} parent=1 // pred_region
      %55 = dma.done [#allocation6], 5120
    $region37: #{tpu_custom_call.1} parent=1 // pred_fallthru
      _
    %v57 = vld [vmem:[%s0] sm:$0xff]
    %v58 = vld [vmem:[%s0 + $0x8] sm:$0xff]
    %v59 = vld [vmem:[%s0 + $0x10] sm:$0xff]
    %v60 = vld [vmem:[%s0 + $0x18] sm:$0xff]
    %v65 = vcombine.low %v57, %v58
    %v66 = vcombine.high %v57, %v58
    %v67 = vcombine.low %v59, %v60
    %v68 = vcombine.high %v59, %v60
    %v70 = vunpack.c.l.s4 1983009808
    %v71 = vunpack.c.0.s8 %v70
    %v72 = vlaneseq
    %v73 = vshrl.u32 %v72, 7
    %v74 = vsub.s32 %v71, %v73
    %v75 = vrot.slane %v65, %v74
    %v77 = vunpack.c.l.s4 1983009808
    %v78 = vunpack.c.0.s8 %v77
    %v79 = vlaneseq
    %v80 = vshrl.u32 %v79, 7
    %v81 = vsub.s32 %v78, %v80
    %v82 = vrot.slane %v66, %v81
    %v84 = vunpack.c.l.s4 1983009808
    %v85 = vunpack.c.0.s8 %v84
    %v86 = vlaneseq
    %v87 = vshrl.u32 %v86, 7
    %v88 = vsub.s32 %v85, %v87
    %v89 = vrot.slane %v67, %v88
    %v91 = vunpack.c.l.s4 1983009808
    %v92 = vunpack.c.0.s8 %v91
    %v93 = vlaneseq
    %v94 = vshrl.u32 %v93, 7
    %v95 = vsub.s32 %v92, %v94
    %v96 = vrot.slane %v68, %v95
    %v97 = vcombine.low %v75, %v89
    %v98 = vcombine.high %v75, %v89
    %v99 = vcombine.low %v82, %v96
    %v100 = vcombine.high %v82, %v96
    %v105 = vpack.c.bf16 %v97, %v97
    %v106 = vpack.c.bf16 %v98, %v98
    %v107 = vpack.c.bf16 %v99, %v99
    %v108 = vpack.c.bf16 %v100, %v100
    %v109 = vld [vmem:[#allocation3] sm:$0xf]
    %v110 = vld [vmem:[#allocation3 + $0x4] sm:$0xf]
    %v111 = vld [vmem:[#allocation3 + $0x8] sm:$0xf]
    %v112 = vld [vmem:[#allocation3 + $0xc] sm:$0xf]
    %v113 = vld [vmem:[#allocation3 + $0x10] sm:$0xf]
    %v114 = vld [vmem:[#allocation3 + $0x14] sm:$0xf]
    %v115 = vld [vmem:[#allocation3 + $0x18] sm:$0xf]
    %v116 = vld [vmem:[#allocation3 + $0x1c] sm:$0xf]
    %v117 = vld [vmem:[#allocation3 + $0x20] sm:$0xf]
    %v118 = vld [vmem:[#allocation3 + $0x24] sm:$0xf]
    %v119 = vld [vmem:[#allocation3 + $0x28] sm:$0xf]
    %v120 = vld [vmem:[#allocation3 + $0x2c] sm:$0xf]
    %v121 = vld [vmem:[#allocation3 + $0x30] sm:$0xf]
    %v122 = vld [vmem:[#allocation3 + $0x34] sm:$0xf]
    %v123 = vld [vmem:[#allocation3 + $0x38] sm:$0xf]
    %v124 = vld [vmem:[#allocation3 + $0x3c] sm:$0xf]
    %v125 = vld [vmem:[#allocation3 + $0x40] sm:$0xf]
    %v126 = vld [vmem:[#allocation3 + $0x44] sm:$0xf]
    %v127 = vld [vmem:[#allocation3 + $0x48] sm:$0xf]
    %v128 = vld [vmem:[#allocation3 + $0x4c] sm:$0xf]
    %v129 = vld [vmem:[#allocation3 + $0x50] sm:$0xf]
    %v130 = vld [vmem:[#allocation3 + $0x54] sm:$0xf]
    %v131 = vld [vmem:[#allocation3 + $0x58] sm:$0xf]
    %v132 = vld [vmem:[#allocation3 + $0x5c] sm:$0xf]
    %v133 = vld [vmem:[#allocation3 + $0x60] sm:$0xf]
    %v134 = vld [vmem:[#allocation3 + $0x64] sm:$0xf]
    %v135 = vld [vmem:[#allocation3 + $0x68] sm:$0xf]
    %v136 = vld [vmem:[#allocation3 + $0x6c] sm:$0xf]
    %v137 = vld [vmem:[#allocation3 + $0x70] sm:$0xf]
    %v138 = vld [vmem:[#allocation3 + $0x74] sm:$0xf]
    %v139 = vld [vmem:[#allocation3 + $0x78] sm:$0xf]
    %v140 = vld [vmem:[#allocation3 + $0x7c] sm:$0xf]
    %v141 = vld [vmem:[#allocation3 + $0x80] sm:$0xf]
    %v142 = vld [vmem:[#allocation3 + $0x84] sm:$0xf]
    %v143 = vld [vmem:[#allocation3 + $0x88] sm:$0xf]
    %v144 = vld [vmem:[#allocation3 + $0x8c] sm:$0xf]
    %v145 = vld [vmem:[#allocation3 + $0x90] sm:$0xf]
    %v146 = vld [vmem:[#allocation3 + $0x94] sm:$0xf]
    %v147 = vld [vmem:[#allocation3 + $0x98] sm:$0xf]
    %v148 = vld [vmem:[#allocation3 + $0x9c] sm:$0xf]
    %v149 = vld [vmem:[#allocation3 + $0xa0] sm:$0xf]
    %v150 = vld [vmem:[#allocation3 + $0xa4] sm:$0xf]
    %v151 = vld [vmem:[#allocation3 + $0xa8] sm:$0xf]
    %v152 = vld [vmem:[#allocation3 + $0xac] sm:$0xf]
    %v153 = vld [vmem:[#allocation3 + $0xb0] sm:$0xf]
    %v154 = vld [vmem:[#allocation3 + $0xb4] sm:$0xf]
    %v155 = vld [vmem:[#allocation3 + $0xb8] sm:$0xf]
    %v156 = vld [vmem:[#allocation3 + $0xbc] sm:$0xf]
    %v157 = vld [vmem:[#allocation3 + $0xc0] sm:$0xf]
    %v158 = vld [vmem:[#allocation3 + $0xc4] sm:$0xf]
    %v159 = vld [vmem:[#allocation3 + $0xc8] sm:$0xf]
    %v160 = vld [vmem:[#allocation3 + $0xcc] sm:$0xf]
    %v161 = vld [vmem:[#allocation3 + $0xd0] sm:$0xf]
    %v162 = vld [vmem:[#allocation3 + $0xd4] sm:$0xf]
    %v163 = vld [vmem:[#allocation3 + $0xd8] sm:$0xf]
    %v164 = vld [vmem:[#allocation3 + $0xdc] sm:$0xf]
    %v165 = vld [vmem:[#allocation3 + $0xe0] sm:$0xf]
    %v166 = vld [vmem:[#allocation3 + $0xe4] sm:$0xf]
    %v167 = vld [vmem:[#allocation3 + $0xe8] sm:$0xf]
    %v168 = vld [vmem:[#allocation3 + $0xec] sm:$0xf]
    %v169 = vld [vmem:[#allocation3 + $0xf0] sm:$0xf]
    %v170 = vld [vmem:[#allocation3 + $0xf4] sm:$0xf]
    %v171 = vld [vmem:[#allocation3 + $0xf8] sm:$0xf]
    %v172 = vld [vmem:[#allocation3 + $0xfc] sm:$0xf]
    %v173 = vld [vmem:[%s2] sm:$0x1]
    %v175 = vlaneseq
    %v176 = vshrl.u32 %v175, 7
    %v177 = vsub.s32 0, %v176
    %v178 = vrot.slane %v173, %v177
    %v244 = vunpack.c.l.b16 %v109
    %v245 = vunpack.c.l.b16 %v110
    %v246 = vunpack.c.l.b16 %v111
    %v247 = vunpack.c.l.b16 %v112
    %v248 = vunpack.c.l.b16 %v113
    %v249 = vunpack.c.l.b16 %v114
    %v250 = vunpack.c.l.b16 %v115
    %v251 = vunpack.c.l.b16 %v116
    %v252 = vunpack.c.l.b16 %v117
    %v253 = vunpack.c.l.b16 %v118
    %v254 = vunpack.c.l.b16 %v119
    %v255 = vunpack.c.l.b16 %v120
    %v256 = vunpack.c.l.b16 %v121
    %v257 = vunpack.c.l.b16 %v122
    %v258 = vunpack.c.l.b16 %v123
    %v259 = vunpack.c.l.b16 %v124
    %v260 = vunpack.c.l.b16 %v125
    %v261 = vunpack.c.l.b16 %v126
    %v262 = vunpack.c.l.b16 %v127
    %v263 = vunpack.c.l.b16 %v128
    %v264 = vunpack.c.l.b16 %v129
    %v265 = vunpack.c.l.b16 %v130
    %v266 = vunpack.c.l.b16 %v131
    %v267 = vunpack.c.l.b16 %v132
    %v268 = vunpack.c.l.b16 %v133
    %v269 = vunpack.c.l.b16 %v134
    %v270 = vunpack.c.l.b16 %v135
    %v271 = vunpack.c.l.b16 %v136
    %v272 = vunpack.c.l.b16 %v137
    %v273 = vunpack.c.l.b16 %v138
    %v274 = vunpack.c.l.b16 %v139
    %v275 = vunpack.c.l.b16 %v140
    %v276 = vunpack.c.l.b16 %v141
    %v277 = vunpack.c.l.b16 %v142
    %v278 = vunpack.c.l.b16 %v143
    %v279 = vunpack.c.l.b16 %v144
    %v280 = vunpack.c.l.b16 %v145
    %v281 = vunpack.c.l.b16 %v146
    %v282 = vunpack.c.l.b16 %v147
    %v283 = vunpack.c.l.b16 %v148
    %v284 = vunpack.c.l.b16 %v149
    %v285 = vunpack.c.l.b16 %v150
    %v286 = vunpack.c.l.b16 %v151
    %v287 = vunpack.c.l.b16 %v152
    %v288 = vunpack.c.l.b16 %v153
    %v289 = vunpack.c.l.b16 %v154
    %v290 = vunpack.c.l.b16 %v155
    %v291 = vunpack.c.l.b16 %v156
    %v292 = vunpack.c.l.b16 %v157
    %v293 = vunpack.c.l.b16 %v158
    %v294 = vunpack.c.l.b16 %v159
    %v295 = vunpack.c.l.b16 %v160
    %v296 = vunpack.c.l.b16 %v161
    %v297 = vunpack.c.l.b16 %v162
    %v298 = vunpack.c.l.b16 %v163
    %v299 = vunpack.c.l.b16 %v164
    %v300 = vunpack.c.l.b16 %v165
    %v301 = vunpack.c.l.b16 %v166
    %v302 = vunpack.c.l.b16 %v167
    %v303 = vunpack.c.l.b16 %v168
    %v304 = vunpack.c.l.b16 %v169
    %v305 = vunpack.c.l.b16 %v170
    %v306 = vunpack.c.l.b16 %v171
    %v307 = vunpack.c.l.b16 %v172
    %v308 = vpack.c.b16 %v245, %v244
    %v309 = vpack.c.b16 %v247, %v246
    %v310 = vpack.c.b16 %v249, %v248
    %v311 = vpack.c.b16 %v251, %v250
    %v312 = vpack.c.b16 %v253, %v252
    %v313 = vpack.c.b16 %v255, %v254
    %v314 = vpack.c.b16 %v257, %v256
    %v315 = vpack.c.b16 %v259, %v258
    %v316 = vpack.c.b16 %v261, %v260
    %v317 = vpack.c.b16 %v263, %v262
    %v318 = vpack.c.b16 %v265, %v264
    %v319 = vpack.c.b16 %v267, %v266
    %v320 = vpack.c.b16 %v269, %v268
    %v321 = vpack.c.b16 %v271, %v270
    %v322 = vpack.c.b16 %v273, %v272
    %v323 = vpack.c.b16 %v275, %v274
    %v324 = vpack.c.b16 %v277, %v276
    %v325 = vpack.c.b16 %v279, %v278
    %v326 = vpack.c.b16 %v281, %v280
    %v327 = vpack.c.b16 %v283, %v282
    %v328 = vpack.c.b16 %v285, %v284
    %v329 = vpack.c.b16 %v287, %v286
    %v330 = vpack.c.b16 %v289, %v288
    %v331 = vpack.c.b16 %v291, %v290
    %v332 = vpack.c.b16 %v293, %v292
    %v333 = vpack.c.b16 %v295, %v294
    %v334 = vpack.c.b16 %v297, %v296
    %v335 = vpack.c.b16 %v299, %v298
    %v336 = vpack.c.b16 %v301, %v300
    %v337 = vpack.c.b16 %v303, %v302
    %v338 = vpack.c.b16 %v305, %v304
    %v339 = vpack.c.b16 %v307, %v306
    %372 = vmatprep.subr.bf16.mxu0 0
    %373 = vmatpush1.bf16.msra.mxu0 %v308
    %374 = vmatprep.subr.bf16.mxu0 0
    %375 = vmatpush1.bf16.msra.mxu0 %v309
    %376 = vmatprep.subr.bf16.mxu0 0
    %377 = vmatpush1.bf16.msra.mxu0 %v310
    %378 = vmatprep.subr.bf16.mxu0 0
    %379 = vmatpush1.bf16.msra.mxu0 %v311
    %380 = vmatprep.subr.bf16.mxu0 0
    %381 = vmatpush1.bf16.msra.mxu0 %v312
    %382 = vmatprep.subr.bf16.mxu0 0
    %383 = vmatpush1.bf16.msra.mxu0 %v313
    %384 = vmatprep.subr.bf16.mxu0 0
    %385 = vmatpush1.bf16.msra.mxu0 %v314
    %386 = vmatprep.subr.bf16.mxu0 0
    %387 = vmatpush1.bf16.msra.mxu0 %v315
    %388 = vmatprep.subr.bf16.mxu0 0
    %389 = vmatpush1.bf16.msra.mxu0 %v316
    %390 = vmatprep.subr.bf16.mxu0 0
    %391 = vmatpush1.bf16.msra.mxu0 %v317
    %392 = vmatprep.subr.bf16.mxu0 0
    %393 = vmatpush1.bf16.msra.mxu0 %v318
    %394 = vmatprep.subr.bf16.mxu0 0
    %395 = vmatpush1.bf16.msra.mxu0 %v319
    %396 = vmatprep.subr.bf16.mxu0 0
    %397 = vmatpush1.bf16.msra.mxu0 %v320
    %398 = vmatprep.subr.bf16.mxu0 0
    %399 = vmatpush1.bf16.msra.mxu0 %v321
    %400 = vmatprep.subr.bf16.mxu0 0
    %401 = vmatpush1.bf16.msra.mxu0 %v322
    %402 = vmatprep.subr.bf16.mxu0 0
    %403 = vmatpush1.bf16.msra.mxu0 %v323
    %404 = vmatprep.mubr.bf16.mxu0 %v106
    %405 = vmatmul.mubr.bf16.gmra.mrb[0].mxu0 %v105
    %v406 = vpop.f32.mrb[0].mxu0
    %v407 = vadd.f32 %v178, %v406
    %v408 = vpop.f32.mrb[0].mxu0
    %v409 = vpop.f32.mrb[0].mxu0
    %v410 = vpop.f32.mrb[0].mxu0
    %411 = vdwg.mxu0
    %412 = vmatprep.subr.bf16.mxu0 0
    %413 = vmatpush1.bf16.msra.mxu0 %v324
    %414 = vmatprep.subr.bf16.mxu0 0
    %415 = vmatpush1.bf16.msra.mxu0 %v325
    %416 = vmatprep.subr.bf16.mxu0 0
    %417 = vmatpush1.bf16.msra.mxu0 %v326
    %418 = vmatprep.subr.bf16.mxu0 0
    %419 = vmatpush1.bf16.msra.mxu0 %v327
    %420 = vmatprep.subr.bf16.mxu0 0
    %421 = vmatpush1.bf16.msra.mxu0 %v328
    %422 = vmatprep.subr.bf16.mxu0 0
    %423 = vmatpush1.bf16.msra.mxu0 %v329
    %424 = vmatprep.subr.bf16.mxu0 0
    %425 = vmatpush1.bf16.msra.mxu0 %v330
    %426 = vmatprep.subr.bf16.mxu0 0
    %427 = vmatpush1.bf16.msra.mxu0 %v331
    %428 = vmatprep.subr.bf16.mxu0 0
    %429 = vmatpush1.bf16.msra.mxu0 %v332
    %430 = vmatprep.subr.bf16.mxu0 0
    %431 = vmatpush1.bf16.msra.mxu0 %v333
    %432 = vmatprep.subr.bf16.mxu0 0
    %433 = vmatpush1.bf16.msra.mxu0 %v334
    %434 = vmatprep.subr.bf16.mxu0 0
    %435 = vmatpush1.bf16.msra.mxu0 %v335
    %436 = vmatprep.subr.bf16.mxu0 0
    %437 = vmatpush1.bf16.msra.mxu0 %v336
    %438 = vmatprep.subr.bf16.mxu0 0
    %439 = vmatpush1.bf16.msra.mxu0 %v337
    %440 = vmatprep.subr.bf16.mxu0 0
    %441 = vmatpush1.bf16.msra.mxu0 %v338
    %442 = vmatprep.subr.bf16.mxu0 0
    %443 = vmatpush1.bf16.msra.mxu0 %v339
    %444 = vmatprep.mubr.bf16.mxu0 %v108
    %445 = vmatmul.mubr.bf16.gmra.mrb[0].mxu0 %v107
    %v446 = vpop.f32.mrb[0].mxu0
    %v447 = vadd.f32 %v407, %v446
    %v448 = vpop.f32.mrb[0].mxu0
    %v449 = vpop.f32.mrb[0].mxu0
    %v450 = vpop.f32.mrb[0].mxu0
    %451 = vdwg.mxu0
    %v452 = vmax.f32 %v447, 0.0
    %v453 = vpack.c.bf16 %v452, %v452
    %v454 = vld [vmem:[#allocation5] sm:$0xf]
    %v455 = vld [vmem:[#allocation5 + $0x4] sm:$0xf]
    %v456 = vld [vmem:[#allocation5 + $0x8] sm:$0xf]
    %v457 = vld [vmem:[#allocation5 + $0xc] sm:$0xf]
    %v458 = vld [vmem:[#allocation5 + $0x10] sm:$0xf]
    %v459 = vld [vmem:[#allocation5 + $0x14] sm:$0xf]
    %v460 = vld [vmem:[#allocation5 + $0x18] sm:$0xf]
    %v461 = vld [vmem:[#allocation5 + $0x1c] sm:$0xf]
    %v462 = vld [vmem:[#allocation5 + $0x20] sm:$0xf]
    %v463 = vld [vmem:[#allocation5 + $0x24] sm:$0xf]
    %v464 = vld [vmem:[#allocation5 + $0x28] sm:$0xf]
    %v465 = vld [vmem:[#allocation5 + $0x2c] sm:$0xf]
    %v466 = vld [vmem:[#allocation5 + $0x30] sm:$0xf]
    %v467 = vld [vmem:[#allocation5 + $0x34] sm:$0xf]
    %v468 = vld [vmem:[#allocation5 + $0x38] sm:$0xf]
    %v469 = vld [vmem:[#allocation5 + $0x3c] sm:$0xf]
    %v470 = vld [vmem:[%s4] sm:$0x1]
    %v471 = vlaneseq
    %v472 = vshrl.u32 %v471, 7
    %v473 = vsub.s32 0, %v472
    %v474 = vrot.slane %v470, %v473
    %v491 = vunpack.c.l.b16 %v454
    %v492 = vunpack.c.l.b16 %v455
    %v493 = vunpack.c.l.b16 %v456
    %v494 = vunpack.c.l.b16 %v457
    %v495 = vunpack.c.l.b16 %v458
    %v496 = vunpack.c.l.b16 %v459
    %v497 = vunpack.c.l.b16 %v460
    %v498 = vunpack.c.l.b16 %v461
    %v499 = vunpack.c.l.b16 %v462
    %v500 = vunpack.c.l.b16 %v463
    %v501 = vunpack.c.l.b16 %v464
    %v502 = vunpack.c.l.b16 %v465
    %v503 = vunpack.c.l.b16 %v466
    %v504 = vunpack.c.l.b16 %v467
    %v505 = vunpack.c.l.b16 %v468
    %v506 = vunpack.c.l.b16 %v469
    %v507 = vpack.c.b16 %v492, %v491
    %v508 = vpack.c.b16 %v494, %v493
    %v509 = vpack.c.b16 %v496, %v495
    %v510 = vpack.c.b16 %v498, %v497
    %v511 = vpack.c.b16 %v500, %v499
    %v512 = vpack.c.b16 %v502, %v501
    %v513 = vpack.c.b16 %v504, %v503
    %v514 = vpack.c.b16 %v506, %v505
    %523 = vmatprep.subr.bf16.mxu0 0
    %524 = vmatpush1.bf16.msra.mxu0 %v507
    %525 = vmatprep.subr.bf16.mxu0 0
    %526 = vmatpush1.bf16.msra.mxu0 %v508
    %527 = vmatprep.subr.bf16.mxu0 0
    %528 = vmatpush1.bf16.msra.mxu0 %v509
    %529 = vmatprep.subr.bf16.mxu0 0
    %530 = vmatpush1.bf16.msra.mxu0 %v510
    %531 = vmatprep.subr.bf16.mxu0 0
    %532 = vmatpush1.bf16.msra.mxu0 %v511
    %533 = vmatprep.subr.bf16.mxu0 0
    %534 = vmatpush1.bf16.msra.mxu0 %v512
    %535 = vmatprep.subr.bf16.mxu0 0
    %536 = vmatpush1.bf16.msra.mxu0 %v513
    %537 = vmatprep.subr.bf16.mxu0 0
    %538 = vmatpush1.bf16.msra.mxu0 %v514
    %539 = vmatprep.subr.bf16.mxu0 0
    %540 = vmatpush1.bf16.msra.mxu0 0
    %541 = vmatprep.subr.bf16.mxu0 0
    %542 = vmatpush1.bf16.msra.mxu0 0
    %543 = vmatprep.subr.bf16.mxu0 0
    %544 = vmatpush1.bf16.msra.mxu0 0
    %545 = vmatprep.subr.bf16.mxu0 0
    %546 = vmatpush1.bf16.msra.mxu0 0
    %547 = vmatprep.subr.bf16.mxu0 0
    %548 = vmatpush1.bf16.msra.mxu0 0
    %549 = vmatprep.subr.bf16.mxu0 0
    %550 = vmatpush1.bf16.msra.mxu0 0
    %551 = vmatprep.subr.bf16.mxu0 0
    %552 = vmatpush1.bf16.msra.mxu0 0
    %553 = vmatprep.subr.bf16.mxu0 0
    %554 = vmatpush1.bf16.msra.mxu0 0
    %555 = vmatprep.mubr.bf16.mxu0 0
    %556 = vmatmul.mubr.bf16.gmra.mrb[0].mxu0 %v453
    %v557 = vpop.f32.mrb[0].mxu0
    %v558 = vadd.f32 %v474, %v557
    %v559 = vpop.f32.mrb[0].mxu0
    %v560 = vpop.f32.mrb[0].mxu0
    %v561 = vpop.f32.mrb[0].mxu0
    %562 = vdwg.mxu0
    %v563 = vmax.f32 %v558, 0.0
    %v564 = vpack.c.bf16 %v563, %v563
    %s565 = scalar_lea.vmem [#allocation5], 64
    %v566 = vld [vmem:[%s565] sm:$0xf]
    %v567 = vld [vmem:[%s565 + $0x4] sm:$0xf]
    %v568 = vld [vmem:[%s565 + $0x8] sm:$0xf]
    %v569 = vld [vmem:[%s565 + $0xc] sm:$0xf]
    %v570 = vld [vmem:[%s565 + $0x10] sm:$0xf]
    %v571 = vld [vmem:[%s565 + $0x14] sm:$0xf]
    %v572 = vld [vmem:[%s565 + $0x18] sm:$0xf]
    %v573 = vld [vmem:[%s565 + $0x1c] sm:$0xf]
    %v574 = vld [vmem:[%s565 + $0x20] sm:$0xf]
    %v575 = vld [vmem:[%s565 + $0x24] sm:$0xf]
    %v576 = vld [vmem:[%s565 + $0x28] sm:$0xf]
    %v577 = vld [vmem:[%s565 + $0x2c] sm:$0xf]
    %v578 = vld [vmem:[%s565 + $0x30] sm:$0xf]
    %v579 = vld [vmem:[%s565 + $0x34] sm:$0xf]
    %v580 = vld [vmem:[%s565 + $0x38] sm:$0xf]
    %v581 = vld [vmem:[%s565 + $0x3c] sm:$0xf]
    %v582 = vld [vmem:[%s4 + $0x1] sm:$0x1]
    %v583 = vlaneseq
    %v584 = vshrl.u32 %v583, 7
    %v585 = vsub.s32 0, %v584
    %v586 = vrot.slane %v582, %v585
    %v603 = vunpack.c.l.b16 %v566
    %v604 = vunpack.c.l.b16 %v567
    %v605 = vunpack.c.l.b16 %v568
    %v606 = vunpack.c.l.b16 %v569
    %v607 = vunpack.c.l.b16 %v570
    %v608 = vunpack.c.l.b16 %v571
    %v609 = vunpack.c.l.b16 %v572
    %v610 = vunpack.c.l.b16 %v573
    %v611 = vunpack.c.l.b16 %v574
    %v612 = vunpack.c.l.b16 %v575
    %v613 = vunpack.c.l.b16 %v576
    %v614 = vunpack.c.l.b16 %v577
    %v615 = vunpack.c.l.b16 %v578
    %v616 = vunpack.c.l.b16 %v579
    %v617 = vunpack.c.l.b16 %v580
    %v618 = vunpack.c.l.b16 %v581
    %v619 = vpack.c.b16 %v604, %v603
    %v620 = vpack.c.b16 %v606, %v605
    %v621 = vpack.c.b16 %v608, %v607
    %v622 = vpack.c.b16 %v610, %v609
    %v623 = vpack.c.b16 %v612, %v611
    %v624 = vpack.c.b16 %v614, %v613
    %v625 = vpack.c.b16 %v616, %v615
    %v626 = vpack.c.b16 %v618, %v617
    %635 = vmatprep.subr.bf16.mxu0 0
    %636 = vmatpush1.bf16.msra.mxu0 %v619
    %637 = vmatprep.subr.bf16.mxu0 0
    %638 = vmatpush1.bf16.msra.mxu0 %v620
    %639 = vmatprep.subr.bf16.mxu0 0
    %640 = vmatpush1.bf16.msra.mxu0 %v621
    %641 = vmatprep.subr.bf16.mxu0 0
    %642 = vmatpush1.bf16.msra.mxu0 %v622
    %643 = vmatprep.subr.bf16.mxu0 0
    %644 = vmatpush1.bf16.msra.mxu0 %v623
    %645 = vmatprep.subr.bf16.mxu0 0
    %646 = vmatpush1.bf16.msra.mxu0 %v624
    %647 = vmatprep.subr.bf16.mxu0 0
    %648 = vmatpush1.bf16.msra.mxu0 %v625
    %649 = vmatprep.subr.bf16.mxu0 0
    %650 = vmatpush1.bf16.msra.mxu0 %v626
    %651 = vmatprep.subr.bf16.mxu0 0
    %652 = vmatpush1.bf16.msra.mxu0 0
    %653 = vmatprep.subr.bf16.mxu0 0
    %654 = vmatpush1.bf16.msra.mxu0 0
    %655 = vmatprep.subr.bf16.mxu0 0
    %656 = vmatpush1.bf16.msra.mxu0 0
    %657 = vmatprep.subr.bf16.mxu0 0
    %658 = vmatpush1.bf16.msra.mxu0 0
    %659 = vmatprep.subr.bf16.mxu0 0
    %660 = vmatpush1.bf16.msra.mxu0 0
    %661 = vmatprep.subr.bf16.mxu0 0
    %662 = vmatpush1.bf16.msra.mxu0 0
    %663 = vmatprep.subr.bf16.mxu0 0
    %664 = vmatpush1.bf16.msra.mxu0 0
    %665 = vmatprep.subr.bf16.mxu0 0
    %666 = vmatpush1.bf16.msra.mxu0 0
    %667 = vmatprep.mubr.bf16.mxu0 0
    %668 = vmatmul.mubr.bf16.gmra.mrb[0].mxu0 %v564
    %v669 = vpop.f32.mrb[0].mxu0
    %v670 = vadd.f32 %v586, %v669
    %v671 = vpop.f32.mrb[0].mxu0
    %v672 = vpop.f32.mrb[0].mxu0
    %v673 = vpop.f32.mrb[0].mxu0
    %674 = vdwg.mxu0
    %v675 = vmax.f32 %v670, 0.0
    %v676 = vpack.c.bf16 %v675, %v675
    %s677 = scalar_lea.vmem [#allocation5], 128
    %v678 = vld [vmem:[%s677] sm:$0xf]
    %v679 = vld [vmem:[%s677 + $0x4] sm:$0xf]
    %v680 = vld [vmem:[%s677 + $0x8] sm:$0xf]
    %v681 = vld [vmem:[%s677 + $0xc] sm:$0xf]
    %v682 = vld [vmem:[%s677 + $0x10] sm:$0xf]
    %v683 = vld [vmem:[%s677 + $0x14] sm:$0xf]
    %v684 = vld [vmem:[%s677 + $0x18] sm:$0xf]
    %v685 = vld [vmem:[%s677 + $0x1c] sm:$0xf]
    %v686 = vld [vmem:[%s677 + $0x20] sm:$0xf]
    %v687 = vld [vmem:[%s677 + $0x24] sm:$0xf]
    %v688 = vld [vmem:[%s677 + $0x28] sm:$0xf]
    %v689 = vld [vmem:[%s677 + $0x2c] sm:$0xf]
    %v690 = vld [vmem:[%s677 + $0x30] sm:$0xf]
    %v691 = vld [vmem:[%s677 + $0x34] sm:$0xf]
    %v692 = vld [vmem:[%s677 + $0x38] sm:$0xf]
    %v693 = vld [vmem:[%s677 + $0x3c] sm:$0xf]
    %v694 = vld [vmem:[%s4 + $0x2] sm:$0x1]
    %v695 = vlaneseq
    %v696 = vshrl.u32 %v695, 7
    %v697 = vsub.s32 0, %v696
    %v698 = vrot.slane %v694, %v697
    %v715 = vunpack.c.l.b16 %v678
    %v716 = vunpack.c.l.b16 %v679
    %v717 = vunpack.c.l.b16 %v680
    %v718 = vunpack.c.l.b16 %v681
    %v719 = vunpack.c.l.b16 %v682
    %v720 = vunpack.c.l.b16 %v683
    %v721 = vunpack.c.l.b16 %v684
    %v722 = vunpack.c.l.b16 %v685
    %v723 = vunpack.c.l.b16 %v686
    %v724 = vunpack.c.l.b16 %v687
    %v725 = vunpack.c.l.b16 %v688
    %v726 = vunpack.c.l.b16 %v689
    %v727 = vunpack.c.l.b16 %v690
    %v728 = vunpack.c.l.b16 %v691
    %v729 = vunpack.c.l.b16 %v692
    %v730 = vunpack.c.l.b16 %v693
    %v731 = vpack.c.b16 %v716, %v715
    %v732 = vpack.c.b16 %v718, %v717
    %v733 = vpack.c.b16 %v720, %v719
    %v734 = vpack.c.b16 %v722, %v721
    %v735 = vpack.c.b16 %v724, %v723
    %v736 = vpack.c.b16 %v726, %v725
    %v737 = vpack.c.b16 %v728, %v727
    %v738 = vpack.c.b16 %v730, %v729
    %747 = vmatprep.subr.bf16.mxu0 0
    %748 = vmatpush1.bf16.msra.mxu0 %v731
    %749 = vmatprep.subr.bf16.mxu0 0
    %750 = vmatpush1.bf16.msra.mxu0 %v732
    %751 = vmatprep.subr.bf16.mxu0 0
    %752 = vmatpush1.bf16.msra.mxu0 %v733
    %753 = vmatprep.subr.bf16.mxu0 0
    %754 = vmatpush1.bf16.msra.mxu0 %v734
    %755 = vmatprep.subr.bf16.mxu0 0
    %756 = vmatpush1.bf16.msra.mxu0 %v735
    %757 = vmatprep.subr.bf16.mxu0 0
    %758 = vmatpush1.bf16.msra.mxu0 %v736
    %759 = vmatprep.subr.bf16.mxu0 0
    %760 = vmatpush1.bf16.msra.mxu0 %v737
    %761 = vmatprep.subr.bf16.mxu0 0
    %762 = vmatpush1.bf16.msra.mxu0 %v738
    %763 = vmatprep.subr.bf16.mxu0 0
    %764 = vmatpush1.bf16.msra.mxu0 0
    %765 = vmatprep.subr.bf16.mxu0 0
    %766 = vmatpush1.bf16.msra.mxu0 0
    %767 = vmatprep.subr.bf16.mxu0 0
    %768 = vmatpush1.bf16.msra.mxu0 0
    %769 = vmatprep.subr.bf16.mxu0 0
    %770 = vmatpush1.bf16.msra.mxu0 0
    %771 = vmatprep.subr.bf16.mxu0 0
    %772 = vmatpush1.bf16.msra.mxu0 0
    %773 = vmatprep.subr.bf16.mxu0 0
    %774 = vmatpush1.bf16.msra.mxu0 0
    %775 = vmatprep.subr.bf16.mxu0 0
    %776 = vmatpush1.bf16.msra.mxu0 0
    %777 = vmatprep.subr.bf16.mxu0 0
    %778 = vmatpush1.bf16.msra.mxu0 0
    %779 = vmatprep.mubr.bf16.mxu0 0
    %780 = vmatmul.mubr.bf16.gmra.mrb[0].mxu0 %v676
    %v781 = vpop.f32.mrb[0].mxu0
    %v782 = vadd.f32 %v698, %v781
    %v783 = vpop.f32.mrb[0].mxu0
    %v784 = vpop.f32.mrb[0].mxu0
    %v785 = vpop.f32.mrb[0].mxu0
    %786 = vdwg.mxu0
    %v787 = vmax.f32 %v782, 0.0
    %v788 = vpack.c.bf16 %v787, %v787
    %s789 = scalar_lea.vmem [#allocation5], 192
    %v790 = vld [vmem:[%s789] sm:$0xf]
    %v791 = vld [vmem:[%s789 + $0x4] sm:$0xf]
    %v792 = vld [vmem:[%s789 + $0x8] sm:$0xf]
    %v793 = vld [vmem:[%s789 + $0xc] sm:$0xf]
    %v794 = vld [vmem:[%s789 + $0x10] sm:$0xf]
    %v795 = vld [vmem:[%s789 + $0x14] sm:$0xf]
    %v796 = vld [vmem:[%s789 + $0x18] sm:$0xf]
    %v797 = vld [vmem:[%s789 + $0x1c] sm:$0xf]
    %v798 = vld [vmem:[%s789 + $0x20] sm:$0xf]
    %v799 = vld [vmem:[%s789 + $0x24] sm:$0xf]
    %v800 = vld [vmem:[%s789 + $0x28] sm:$0xf]
    %v801 = vld [vmem:[%s789 + $0x2c] sm:$0xf]
    %v802 = vld [vmem:[%s789 + $0x30] sm:$0xf]
    %v803 = vld [vmem:[%s789 + $0x34] sm:$0xf]
    %v804 = vld [vmem:[%s789 + $0x38] sm:$0xf]
    %v805 = vld [vmem:[%s789 + $0x3c] sm:$0xf]
    %v806 = vld [vmem:[%s4 + $0x3] sm:$0x1]
    %v807 = vlaneseq
    %v808 = vshrl.u32 %v807, 7
    %v809 = vsub.s32 0, %v808
    %v810 = vrot.slane %v806, %v809
    %v827 = vunpack.c.l.b16 %v790
    %v828 = vunpack.c.l.b16 %v791
    %v829 = vunpack.c.l.b16 %v792
    %v830 = vunpack.c.l.b16 %v793
    %v831 = vunpack.c.l.b16 %v794
    %v832 = vunpack.c.l.b16 %v795
    %v833 = vunpack.c.l.b16 %v796
    %v834 = vunpack.c.l.b16 %v797
    %v835 = vunpack.c.l.b16 %v798
    %v836 = vunpack.c.l.b16 %v799
    %v837 = vunpack.c.l.b16 %v800
    %v838 = vunpack.c.l.b16 %v801
    %v839 = vunpack.c.l.b16 %v802
    %v840 = vunpack.c.l.b16 %v803
    %v841 = vunpack.c.l.b16 %v804
    %v842 = vunpack.c.l.b16 %v805
    %v843 = vpack.c.b16 %v828, %v827
    %v844 = vpack.c.b16 %v830, %v829
    %v845 = vpack.c.b16 %v832, %v831
    %v846 = vpack.c.b16 %v834, %v833
    %v847 = vpack.c.b16 %v836, %v835
    %v848 = vpack.c.b16 %v838, %v837
    %v849 = vpack.c.b16 %v840, %v839
    %v850 = vpack.c.b16 %v842, %v841
    %859 = vmatprep.subr.bf16.mxu0 0
    %860 = vmatpush1.bf16.msra.mxu0 %v843
    %861 = vmatprep.subr.bf16.mxu0 0
    %862 = vmatpush1.bf16.msra.mxu0 %v844
    %863 = vmatprep.subr.bf16.mxu0 0
    %864 = vmatpush1.bf16.msra.mxu0 %v845
    %865 = vmatprep.subr.bf16.mxu0 0
    %866 = vmatpush1.bf16.msra.mxu0 %v846
    %867 = vmatprep.subr.bf16.mxu0 0
    %868 = vmatpush1.bf16.msra.mxu0 %v847
    %869 = vmatprep.subr.bf16.mxu0 0
    %870 = vmatpush1.bf16.msra.mxu0 %v848
    %871 = vmatprep.subr.bf16.mxu0 0
    %872 = vmatpush1.bf16.msra.mxu0 %v849
    %873 = vmatprep.subr.bf16.mxu0 0
    %874 = vmatpush1.bf16.msra.mxu0 %v850
    %875 = vmatprep.subr.bf16.mxu0 0
    %876 = vmatpush1.bf16.msra.mxu0 0
    %877 = vmatprep.subr.bf16.mxu0 0
    %878 = vmatpush1.bf16.msra.mxu0 0
    %879 = vmatprep.subr.bf16.mxu0 0
    %880 = vmatpush1.bf16.msra.mxu0 0
    %881 = vmatprep.subr.bf16.mxu0 0
    %882 = vmatpush1.bf16.msra.mxu0 0
    %883 = vmatprep.subr.bf16.mxu0 0
    %884 = vmatpush1.bf16.msra.mxu0 0
    %885 = vmatprep.subr.bf16.mxu0 0
    %886 = vmatpush1.bf16.msra.mxu0 0
    %887 = vmatprep.subr.bf16.mxu0 0
    %888 = vmatpush1.bf16.msra.mxu0 0
    %889 = vmatprep.subr.bf16.mxu0 0
    %890 = vmatpush1.bf16.msra.mxu0 0
    %891 = vmatprep.mubr.bf16.mxu0 0
    %892 = vmatmul.mubr.bf16.gmra.mrb[0].mxu0 %v788
    %v893 = vpop.f32.mrb[0].mxu0
    %v894 = vadd.f32 %v810, %v893
    %v895 = vpop.f32.mrb[0].mxu0
    %v896 = vpop.f32.mrb[0].mxu0
    %v897 = vpop.f32.mrb[0].mxu0
    %898 = vdwg.mxu0
    %v899 = vmax.f32 %v894, 0.0
    %v900 = vpack.c.bf16 %v899, %v899
    %s901 = scalar_lea.vmem [#allocation5], 256
    %v902 = vld [vmem:[%s901] sm:$0xf]
    %v903 = vld [vmem:[%s901 + $0x4] sm:$0xf]
    %v904 = vld [vmem:[%s901 + $0x8] sm:$0xf]
    %v905 = vld [vmem:[%s901 + $0xc] sm:$0xf]
    %v906 = vld [vmem:[%s901 + $0x10] sm:$0xf]
    %v907 = vld [vmem:[%s901 + $0x14] sm:$0xf]
    %v908 = vld [vmem:[%s901 + $0x18] sm:$0xf]
    %v909 = vld [vmem:[%s901 + $0x1c] sm:$0xf]
    %v910 = vld [vmem:[%s901 + $0x20] sm:$0xf]
    %v911 = vld [vmem:[%s901 + $0x24] sm:$0xf]
    %v912 = vld [vmem:[%s901 + $0x28] sm:$0xf]
    %v913 = vld [vmem:[%s901 + $0x2c] sm:$0xf]
    %v914 = vld [vmem:[%s901 + $0x30] sm:$0xf]
    %v915 = vld [vmem:[%s901 + $0x34] sm:$0xf]
    %v916 = vld [vmem:[%s901 + $0x38] sm:$0xf]
    %v917 = vld [vmem:[%s901 + $0x3c] sm:$0xf]
    %v918 = vld [vmem:[%s4 + $0x4] sm:$0x1]
    %v919 = vlaneseq
    %v920 = vshrl.u32 %v919, 7
    %v921 = vsub.s32 0, %v920
    %v922 = vrot.slane %v918, %v921
    %v939 = vunpack.c.l.b16 %v902
    %v940 = vunpack.c.l.b16 %v903
    %v941 = vunpack.c.l.b16 %v904
    %v942 = vunpack.c.l.b16 %v905
    %v943 = vunpack.c.l.b16 %v906
    %v944 = vunpack.c.l.b16 %v907
    %v945 = vunpack.c.l.b16 %v908
    %v946 = vunpack.c.l.b16 %v909
    %v947 = vunpack.c.l.b16 %v910
    %v948 = vunpack.c.l.b16 %v911
    %v949 = vunpack.c.l.b16 %v912
    %v950 = vunpack.c.l.b16 %v913
    %v951 = vunpack.c.l.b16 %v914
    %v952 = vunpack.c.l.b16 %v915
    %v953 = vunpack.c.l.b16 %v916
    %v954 = vunpack.c.l.b16 %v917
    %v955 = vpack.c.b16 %v940, %v939
    %v956 = vpack.c.b16 %v942, %v941
    %v957 = vpack.c.b16 %v944, %v943
    %v958 = vpack.c.b16 %v946, %v945
    %v959 = vpack.c.b16 %v948, %v947
    %v960 = vpack.c.b16 %v950, %v949
    %v961 = vpack.c.b16 %v952, %v951
    %v962 = vpack.c.b16 %v954, %v953
    %971 = vmatprep.subr.bf16.mxu0 0
    %972 = vmatpush1.bf16.msra.mxu0 %v955
    %973 = vmatprep.subr.bf16.mxu0 0
    %974 = vmatpush1.bf16.msra.mxu0 %v956
    %975 = vmatprep.subr.bf16.mxu0 0
    %976 = vmatpush1.bf16.msra.mxu0 %v957
    %977 = vmatprep.subr.bf16.mxu0 0
    %978 = vmatpush1.bf16.msra.mxu0 %v958
    %979 = vmatprep.subr.bf16.mxu0 0
    %980 = vmatpush1.bf16.msra.mxu0 %v959
    %981 = vmatprep.subr.bf16.mxu0 0
    %982 = vmatpush1.bf16.msra.mxu0 %v960
    %983 = vmatprep.subr.bf16.mxu0 0
    %984 = vmatpush1.bf16.msra.mxu0 %v961
    %985 = vmatprep.subr.bf16.mxu0 0
    %986 = vmatpush1.bf16.msra.mxu0 %v962
    %987 = vmatprep.subr.bf16.mxu0 0
    %988 = vmatpush1.bf16.msra.mxu0 0
    %989 = vmatprep.subr.bf16.mxu0 0
    %990 = vmatpush1.bf16.msra.mxu0 0
    %991 = vmatprep.subr.bf16.mxu0 0
    %992 = vmatpush1.bf16.msra.mxu0 0
    %993 = vmatprep.subr.bf16.mxu0 0
    %994 = vmatpush1.bf16.msra.mxu0 0
    %995 = vmatprep.subr.bf16.mxu0 0
    %996 = vmatpush1.bf16.msra.mxu0 0
    %997 = vmatprep.subr.bf16.mxu0 0
    %998 = vmatpush1.bf16.msra.mxu0 0
    %999 = vmatprep.subr.bf16.mxu0 0
    %1000 = vmatpush1.bf16.msra.mxu0 0
    %1001 = vmatprep.subr.bf16.mxu0 0
    %1002 = vmatpush1.bf16.msra.mxu0 0
    %1003 = vmatprep.mubr.bf16.mxu0 0
    %1004 = vmatmul.mubr.bf16.gmra.mrb[0].mxu0 %v900
    %v1005 = vpop.f32.mrb[0].mxu0
    %v1006 = vadd.f32 %v922, %v1005
    %v1007 = vpop.f32.mrb[0].mxu0
    %v1008 = vpop.f32.mrb[0].mxu0
    %v1009 = vpop.f32.mrb[0].mxu0
    %1010 = vdwg.mxu0
    %v1011 = vmax.f32 %v1006, 0.0
    %v1012 = vpack.c.bf16 %v1011, %v1011
    %v1013 = vld [vmem:[%s5] sm:$0xf]
    %v1014 = vld [vmem:[%s5 + $0x4] sm:$0xf]
    %v1015 = vld [vmem:[%s5 + $0x8] sm:$0xf]
    %v1016 = vld [vmem:[%s5 + $0xc] sm:$0xf]
    %v1017 = vld [vmem:[%s5 + $0x10] sm:$0xf]
    %v1018 = vld [vmem:[%s5 + $0x14] sm:$0xf]
    %v1019 = vld [vmem:[%s5 + $0x18] sm:$0xf]
    %v1020 = vld [vmem:[%s5 + $0x1c] sm:$0xf]
    %v1021 = vld [vmem:[%s5 + $0x20] sm:$0xf]
    %v1022 = vld [vmem:[%s5 + $0x24] sm:$0xf]
    %v1023 = vld [vmem:[%s5 + $0x28] sm:$0xf]
    %v1024 = vld [vmem:[%s5 + $0x2c] sm:$0xf]
    %v1025 = vld [vmem:[%s5 + $0x30] sm:$0xf]
    %v1026 = vld [vmem:[%s5 + $0x34] sm:$0xf]
    %v1027 = vld [vmem:[%s5 + $0x38] sm:$0xf]
    %v1028 = vld [vmem:[%s5 + $0x3c] sm:$0xf]
    %v1029 = vld [vmem:[#allocation2] sm:$0x1]
    %v1031 = vlaneseq
    %v1032 = vshrl.u32 %v1031, 7
    %v1033 = vsub.s32 0, %v1032
    %v1034 = vrot.slane %v1029, %v1033
    %v1052 = vunpack.c.l.b16 %v1013
    %v1053 = vunpack.c.l.b16 %v1014
    %v1054 = vunpack.c.l.b16 %v1015
    %v1055 = vunpack.c.l.b16 %v1016
    %v1056 = vunpack.c.l.b16 %v1017
    %v1057 = vunpack.c.l.b16 %v1018
    %v1058 = vunpack.c.l.b16 %v1019
    %v1059 = vunpack.c.l.b16 %v1020
    %v1060 = vunpack.c.l.b16 %v1021
    %v1061 = vunpack.c.l.b16 %v1022
    %v1062 = vunpack.c.l.b16 %v1023
    %v1063 = vunpack.c.l.b16 %v1024
    %v1064 = vunpack.c.l.b16 %v1025
    %v1065 = vunpack.c.l.b16 %v1026
    %v1066 = vunpack.c.l.b16 %v1027
    %v1067 = vunpack.c.l.b16 %v1028
    %v1068 = vpack.c.b16 %v1053, %v1052
    %v1069 = vpack.c.b16 %v1055, %v1054
    %v1070 = vpack.c.b16 %v1057, %v1056
    %v1071 = vpack.c.b16 %v1059, %v1058
    %v1072 = vpack.c.b16 %v1061, %v1060
    %v1073 = vpack.c.b16 %v1063, %v1062
    %v1074 = vpack.c.b16 %v1065, %v1064
    %v1075 = vpack.c.b16 %v1067, %v1066
    %1084 = vmatprep.subr.bf16.mxu0 0
    %1085 = vmatpush1.bf16.msra.mxu0 %v1068
    %1086 = vmatprep.subr.bf16.mxu0 0
    %1087 = vmatpush1.bf16.msra.mxu0 %v1069
    %1088 = vmatprep.subr.bf16.mxu0 0
    %1089 = vmatpush1.bf16.msra.mxu0 %v1070
    %1090 = vmatprep.subr.bf16.mxu0 0
    %1091 = vmatpush1.bf16.msra.mxu0 %v1071
    %1092 = vmatprep.subr.bf16.mxu0 0
    %1093 = vmatpush1.bf16.msra.mxu0 %v1072
    %1094 = vmatprep.subr.bf16.mxu0 0
    %1095 = vmatpush1.bf16.msra.mxu0 %v1073
    %1096 = vmatprep.subr.bf16.mxu0 0
    %1097 = vmatpush1.bf16.msra.mxu0 %v1074
    %1098 = vmatprep.subr.bf16.mxu0 0
    %1099 = vmatpush1.bf16.msra.mxu0 %v1075
    %1100 = vmatprep.subr.bf16.mxu0 0
    %1101 = vmatpush1.bf16.msra.mxu0 0
    %1102 = vmatprep.subr.bf16.mxu0 0
    %1103 = vmatpush1.bf16.msra.mxu0 0
    %1104 = vmatprep.subr.bf16.mxu0 0
    %1105 = vmatpush1.bf16.msra.mxu0 0
    %1106 = vmatprep.subr.bf16.mxu0 0
    %1107 = vmatpush1.bf16.msra.mxu0 0
    %1108 = vmatprep.subr.bf16.mxu0 0
    %1109 = vmatpush1.bf16.msra.mxu0 0
    %1110 = vmatprep.subr.bf16.mxu0 0
    %1111 = vmatpush1.bf16.msra.mxu0 0
    %1112 = vmatprep.subr.bf16.mxu0 0
    %1113 = vmatpush1.bf16.msra.mxu0 0
    %1114 = vmatprep.subr.bf16.mxu0 0
    %1115 = vmatpush1.bf16.msra.mxu0 0
    %1116 = vmatprep.mubr.bf16.mxu0 0
    %1117 = vmatmul.mubr.bf16.gmra.mrb[0].mxu0 %v1012
    %v1118 = vpop.f32.mrb[0].mxu0
    %v1119 = vadd.f32 %v1034, %v1118
    %v1120 = vpop.f32.mrb[0].mxu0
    %v1121 = vpop.f32.mrb[0].mxu0
    %v1122 = vpop.f32.mrb[0].mxu0
    %1123 = vdwg.mxu0
    %v1124 = vxor.u32 %v1119, 2147483648
    %v1125 = vmul.f32 %v1124, 1.442695
    %v1126 = vpow.pop %v1125
    %v1127 = vadd.f32 %v1126, 1.0
    %v1128 = vrcp.pop %v1127
    %v1129 = vmul.f32 1.0, %v1128
    %vm1130 = vcmask 7168
    %1131 = vst.msk [vmem:[#allocation7] sm:$0xff] %vm1130, %v1129
    // Predicated region
    $region38: #{tpu_custom_call.1} parent=1 // pred_check
      _
    $region39: #{tpu_custom_call.1} parent=1 // pred_check_branch
      %1133 = sbr.rel (0) target = $region41
    $region40: #{tpu_custom_call.1} parent=1 // pred_region
      // Predicated region
      $region42: #{tpu_custom_call.1} parent=40 // pred_check
        _
      $region43: #{tpu_custom_call.1} parent=40 // pred_check_branch
        %1135 = sbr.rel (0) target = $region45
      $region44: #{tpu_custom_call.1} parent=40 // pred_region
        // Predicated region
        $region46: #{tpu_custom_call.1} parent=44 // pred_check
          _
        $region47: #{tpu_custom_call.1} parent=44 // pred_check_branch
          %1137 = sbr.rel target = $region49
        $region48: #{tpu_custom_call.1} parent=44 // pred_region
          // Predicated region
          $region61: #{tpu_custom_call.1} parent=48 // pred_check
            _
          $region62: #{tpu_custom_call.1} parent=48 // pred_check_branch
            %1152 = sbr.rel (0) target = $region64
          $region63: #{tpu_custom_call.1} parent=48 // pred_region
            loop: start=0, step=1, limit=1
            $region65: #{tpu_custom_call.1} parent=63 // loop_pre_header
              _
            $region66: #{tpu_custom_call.1} parent=63 // loop_header
              %s1155 = sphi 0, %s1159
              %p1156 = scmp.ge.s32.totalorder %s1155, 1
              %s1160 = sphi [#allocation7], [#allocation7]
              %s1161 = sphi %s7, %s7
            $region67: #{tpu_custom_call.1} parent=63 // loop_header_branch
              %1158 = sbr.rel (%p1156) target = $region71
            $region68: #{tpu_custom_call.1} parent=63 // loop_body
              %v1162 = vld [vmem:[%s1160] sm:$0x3]
              %1163 = vst [vmem:[%s1161] sm:$0x3] %v1162
            $region69: #{tpu_custom_call.1} parent=63 // loop_footer
              %s1159 = sadd.s32 1, %s1155
            $region70: #{tpu_custom_call.1} parent=63 // loop_footer_branch
              %1154 = sbr.rel target = $region66
            $region71: #{tpu_custom_call.1} parent=63 // loop_exit
              _
          $region64: #{tpu_custom_call.1} parent=48 // pred_fallthru
            _
        $region49: #{tpu_custom_call.1} parent=44 // pred_fallthru
          _
        // Predicated region
        $region50: #{tpu_custom_call.1} parent=44 // pred_check
          _
        $region51: #{tpu_custom_call.1} parent=44 // pred_check_branch
          %1139 = sbr.rel (0) target = $region53
        $region52: #{tpu_custom_call.1} parent=44 // pred_region
          loop: start=0, step=1, limit=1
          $region54: #{tpu_custom_call.1} parent=52 // loop_pre_header
            _
          $region55: #{tpu_custom_call.1} parent=52 // loop_header
            %s1142 = sphi 0, %s1146
            %p1143 = scmp.ge.s32.totalorder %s1142, 1
            %s1147 = sphi [#allocation7], [#allocation7]
            %s1148 = sphi %s7, %s7
          $region56: #{tpu_custom_call.1} parent=52 // loop_header_branch
            %1145 = sbr.rel (%p1143) target = $region60
          $region57: #{tpu_custom_call.1} parent=52 // loop_body
            %v1149 = vld [vmem:[%s1147] sm:$0x3]
            %1150 = vst [vmem:[%s1148] sm:$0x3] %v1149
          $region58: #{tpu_custom_call.1} parent=52 // loop_footer
            %s1146 = sadd.s32 1, %s1142
          $region59: #{tpu_custom_call.1} parent=52 // loop_footer_branch
            %1141 = sbr.rel target = $region55
          $region60: #{tpu_custom_call.1} parent=52 // loop_exit
            _
        $region53: #{tpu_custom_call.1} parent=44 // pred_fallthru
          _
      $region45: #{tpu_custom_call.1} parent=40 // pred_fallthru
        _
      %1164 = vnop
    $region41: #{tpu_custom_call.1} parent=1 // pred_fallthru
      _
    // Predicated region
    $region72: #{tpu_custom_call.1} parent=1 // pred_check
      _
    $region73: #{tpu_custom_call.1} parent=1 // pred_check_branch
      %1166 = sbr.rel (0) target = $region75
    $region74: #{tpu_custom_call.1} parent=1 // pred_region
      _
    $region75: #{tpu_custom_call.1} parent=1 // pred_fallthru
      _
    %1167 = vsyncpa [#allocation4], 1
    %1168 = vsyncpa [#allocation6], 1

</llo_original>
